<compile_context>
chip_gen: v6e
topology: v6e:2x2x1
jax: 0.10.0
libtpu: 0.0.40
codegen_flags: <defaults>
</compile_context>

<pallas_src>
import jax
import jax.numpy as jnp
from jax.experimental import pallas as pl
from jax.experimental.pallas import tpu as pltpu

# ----------------------------------------------------------------------------
# Synthetic "feature extractor" configuration (mimics layer1/2/3 of
# wide_resnet50_2: strides 4/8/16, growing channel counts; scaled down).
# ----------------------------------------------------------------------------
LAYER_CFG = [  # (name, spatial stride, out channels)
    ("layer1", 4, 16),
    ("layer2", 8, 32),
    ("layer3", 16, 64),
]
CIN_PAD = 8        # pad RGB (3) input channels up to 8 (reference path only)
INTER_STRIDE = 4   # inter_rate = 1/4 (resolution of layer1, the largest map)


# ----------------------------------------------------------------------------
# Fused Pallas kernel: residual map + per-image min/max norm for NB images
# ----------------------------------------------------------------------------
def _residual_fused_kernel(x1_ref, x2_ref, x3_ref, ahat_ref, bblk_ref, o_ref):
    """One grid step == one block of NB images (all three frames).

    x*_ref:   (NB, C, H, W)   f32 input frames
    ahat_ref: (L*FH, C*H)     bf16 stacked per-layer operator
                              (folded channel combine + pool + upsample over H)
    bblk_ref: (L, 2W, 2FW)    f32 per-layer block-diag pool+upsample over W
                              (one diagonal block per residual stream)
    o_ref:    (NB, FH*FW)     f32 lane-dense normalized residual maps
    """
    nb, c, h, w = x1_ref.shape
    lfh, ch = ahat_ref.shape
    n_layers = bblk_ref.shape[0]
    fh = lfh // n_layers
    fw = bblk_ref.shape[2] // 2

    x1 = x1_ref[...]
    x2 = x2_ref[...]
    x3 = x3_ref[...]

    # Linearity: only the two difference streams are ever consumed
    # (the conv bias cancels exactly).  Row-major (C,H)->(C*H) merge is
    # layout-preserving (last dim unchanged).
    d12 = (x1 - x2).reshape(nb, ch, w)            # (NB, C*H, W)  VPU subtract
    d23 = (x2 - x3).reshape(nb, ch, w)

    # Pack every (image, stream) pair side-by-side in lanes so the fused
    # stacked-layer left matmul runs ONCE per grid step with 2*NB*W lanes.
    pieces = []
    for b in range(nb):                           # static unroll (NB small)
        pieces.append(d12[b])
        pieces.append(d23[b])
    d_all = jnp.concatenate(pieces, axis=-1).astype(jnp.bfloat16)  # (C*H, 2*NB*W)

    # Fused left matmul (all layers stacked in M): bf16 operands, f32 accum.
    y = jnp.dot(ahat_ref[...], d_all,
                preferred_element_type=jnp.float32)                # (L*FH, 2*NB*W)

    rows = []
    for b in range(nb):
        yb = y[:, b * 2 * w:(b + 1) * 2 * w]                       # (L*FH, 2W)
        # Per-layer pool/upsample over W for both streams at once via the
        # block-diagonal right operator (kept f32: K is tiny, protects accum).
        s = jnp.zeros((fh, 2 * fw), jnp.float32)
        for l in range(n_layers):                                  # static unroll
            s = s + jnp.dot(yb[l * fh:(l + 1) * fh, :], bblk_ref[l],
                            preferred_element_type=jnp.float32)    # (FH, 2FW)
        # residual_map = 0.5 * (|sum_c(f1 - f2)| + |sum_c(f2 - f3)|)
        res = 0.5 * (jnp.abs(s[:, :fw]) + jnp.abs(s[:, fw:]))      # (FH, FW)
        # per-image min/max normalization (lane reduce, then sublane reduce)
        rmax = jnp.max(jnp.max(res, axis=-1, keepdims=True), axis=-2, keepdims=True)
        rmin = jnp.min(jnp.min(res, axis=-1, keepdims=True), axis=-2, keepdims=True)
        inv = pl.reciprocal(rmax - rmin + 1e-6, approx=True)       # EUP slot
        normed = (res - rmin) * inv
        # Lane-dense flatten (FH, FW) -> (1, FH*FW) via lane concatenation.
        rows.append(jnp.concatenate([normed[a:a + 1, :] for a in range(fh)],
                                    axis=-1))
    o_ref[...] = jnp.concatenate(rows, axis=0)                     # (NB, FH*FW)


# ----------------------------------------------------------------------------
# Parameters (deterministic, in-script) -- same as the reference extractor
# ----------------------------------------------------------------------------
def init_params(key):
    params = {}
    for name, _stride, cout in LAYER_CFG:
        key, kw, kb = jax.random.split(key, 3)
        w = jax.random.normal(kw, (CIN_PAD, cout), jnp.float32) * 0.1
        b = jax.random.normal(kb, (1, cout), jnp.float32) * 0.01
        params[name] = (w, b)
    return params


# ----------------------------------------------------------------------------
# Build the stacked left operator A_hat (L*FH, C*H) and the per-layer
# block-diagonal right operators B_blk (L, 2W, 2FW).
# ----------------------------------------------------------------------------
def _build_operators(params, C, H, W):
    FH, FW = H // INTER_STRIDE, W // INTER_STRIDE
    ahat_list, bblk_list = [], []
    for name, stride, _cout in LAYER_CFG:
        w, _b = params[name]                 # bias cancels in the differences
        wsum = jnp.sum(w[:C], axis=1)        # (C,) folded channel-sum of 1x1 conv
        rep_h = FH // (H // stride)
        rep_w = FW // (W // stride)
        rows = jnp.arange(H)
        frows = jnp.arange(FH)
        amat = (rows[None, :] // stride == frows[:, None] // rep_h)
        amat = amat.astype(jnp.float32) / stride                    # (FH, H)
        cols = jnp.arange(W)
        fcols = jnp.arange(FW)
        bmat = (cols[:, None] // stride == fcols[None, :] // rep_w)
        bmat = bmat.astype(jnp.float32) / stride                    # (W, FW)
        # fold the channel combine into the left operator:
        # A_hat[a, k*H + i] = wsum[k] * A[a, i]
        ahat = (wsum[None, :, None] * amat[:, None, :]).reshape(FH, C * H)
        ahat_list.append(ahat)
        zero = jnp.zeros_like(bmat)
        bblk = jnp.concatenate(
            [jnp.concatenate([bmat, zero], axis=1),
             jnp.concatenate([zero, bmat], axis=1)], axis=0)         # (2W, 2FW)
        bblk_list.append(bblk)
    return jnp.concatenate(ahat_list, axis=0), jnp.stack(bblk_list)


# ----------------------------------------------------------------------------
# Forward: single fused pallas_call over batch blocks of NB images
# ----------------------------------------------------------------------------
def forward(params, x1, x2, x3):
    N, C, H, W = x1.shape
    FH, FW = H // INTER_STRIDE, W // INTER_STRIDE
    L = len(LAYER_CFG)

    # Batch block size: amortize per-step overhead; at 224x224 keep NB <= ~4
    # on v7x (64 MiB VMEM) and up to ~8-16 on v5e/v6e (128 MiB VMEM).
    NB = next(d for d in (8, 4, 2, 1) if N % d == 0)

    ahat, bblk = _build_operators(params, C, H, W)
    ahat = ahat.astype(jnp.bfloat16)     # bf16 MXU operand (f32 accumulation)

    # Scoped-VMEM limit derived from the per-step footprint (clamped 32-96 MiB).
    step_in_bytes = 3 * NB * C * H * W * 4
    vmem_limit = int(min(96 * 1024 * 1024, max(32 * 1024 * 1024, 8 * step_in_bytes)))

    flat = pl.pallas_call(
        _residual_fused_kernel,
        out_shape=jax.ShapeDtypeStruct((N, FH * FW), jnp.float32),
        grid=(N // NB,),
        in_specs=[
            pl.BlockSpec((NB, C, H, W), lambda n: (n, 0, 0, 0)),
            pl.BlockSpec((NB, C, H, W), lambda n: (n, 0, 0, 0)),
            pl.BlockSpec((NB, C, H, W), lambda n: (n, 0, 0, 0)),
            pl.BlockSpec((L * FH, C * H), lambda n: (0, 0)),
            pl.BlockSpec((L, 2 * W, 2 * FW), lambda n: (0, 0, 0)),
        ],
        out_specs=pl.BlockSpec((NB, FH * FW), lambda n: (n, 0)),
        compiler_params=pltpu.CompilerParams(
            dimension_semantics=("parallel",),       # 2-TC sharding on v7x
            vmem_limit_bytes=vmem_limit,
        ),
    )(x1, x2, x3, ahat, bblk)

    # TODO(synk): AnchorGenerator / roi_align / nms / boolean-mask box
    # selection produce dynamic shapes and sequential data-dependent control
    # flow with no clean Pallas (or jittable JAX) equivalent; the pipeline
    # stops at the normalized residual map.
    return flat.reshape(N, 1, FH, FW)


# ----------------------------------------------------------------------------
# Unfused pure-JAX reference (mirrors the original module's _embed/forward)
# ----------------------------------------------------------------------------
def _embed_reference(params, x):
    N, C, H, W = x.shape
    FH, FW = H // INTER_STRIDE, W // INTER_STRIDE
    feats = []
    for name, stride, cout in LAYER_CFG:
        w, b = params[name]
        h, wsp = H // stride, W // stride
        xp = x.reshape(N, C, h, stride, wsp, stride).mean(axis=(3, 5))
        xf = xp.transpose(0, 2, 3, 1).reshape(N * h * wsp, C)
        xf = jnp.pad(xf, ((0, 0), (0, CIN_PAD - C)))
        y = xf @ w + b
        y = y.reshape(N, h, wsp, cout).transpose(0, 3, 1, 2)
        y = jnp.repeat(jnp.repeat(y, FH // h, axis=2), FW // wsp, axis=3)
        feats.append(y)
    return jnp.concatenate(feats, axis=1)


def forward_reference(params, x1, x2, x3):
    f1 = _embed_reference(params, x1)
    f2 = _embed_reference(params, x2)
    f3 = _embed_reference(params, x3)
    d12 = jnp.abs(jnp.sum(f1 - f2, axis=1, keepdims=True))
    d23 = jnp.abs(jnp.sum(f2 - f3, axis=1, keepdims=True))
    r = 0.5 * (d12 + d23)
    n = r.shape[0]
    rmax = r.reshape(n, -1).max(axis=-1)[:, None, None, None]
    rmin = r.reshape(n, -1).min(axis=-1)[:, None, None, None]
    return (r - rmin) / (rmax - rmin + 1e-6)


# ----------------------------------------------------------------------------
if __name__ == "__main__":
    key = jax.random.PRNGKey(0)
    k1, k2, k3, kp = jax.random.split(key, 4)

    N, C, H, W = 2, 3, 32, 32
    x1 = jax.random.normal(k1, (N, C, H, W), jnp.float32)
    x2 = jax.random.normal(k2, (N, C, H, W), jnp.float32)
    x3 = jax.random.normal(k3, (N, C, H, W), jnp.float32)

    params = init_params(kp)

    out = jax.jit(forward)(params, x1, x2, x3)
    out = jax.block_until_ready(out)

    assert out.shape == (N, 1, H // INTER_STRIDE, W // INTER_STRIDE)
    assert bool(jnp.all(jnp.isfinite(out)))

    # Validate the fused kernel against the unfused f32 reference pipeline.
    # Tolerance is loosened vs. the all-f32 version to account for the bf16
    # MXU operands and the approximate EUP reciprocal (both recommended by the
    # perf review; epilogue remains f32).
    ref = forward_reference(params, x1, x2, x3)
    max_err = float(jnp.max(jnp.abs(out - ref)))
    assert jnp.allclose(out, ref, rtol=3e-2, atol=3e-2), max_err

    print("KERNEL_OK")
</pallas_src>

<mosaic_0001>
module attributes {stable_mosaic.version = 11 : i64} {
  func.func @_residual_fused_kernel(%arg0: i32, %arg1: memref<2x3x32x32xf32, #tpu.memory_space<vmem>>, %arg2: memref<2x3x32x32xf32, #tpu.memory_space<vmem>>, %arg3: memref<2x3x32x32xf32, #tpu.memory_space<vmem>>, %arg4: memref<24x96xbf16, #tpu.memory_space<vmem>>, %arg5: memref<3x64x16xf32, #tpu.memory_space<vmem>>, %arg6: memref<2x64xf32, #tpu.memory_space<vmem>>) attributes {dimension_semantics = [#tpu.dimension_semantics<parallel>], iteration_bounds = array<i64: 1>, scalar_prefetch = 0 : i64, scratch_operands = 0 : i64, tpu.core_type = #tpu.core_type<tc>, window_params = [{transform_indices = @transform_0, window_bounds = array<i64: 2, 3, 32, 32>}, {transform_indices = @transform_1, window_bounds = array<i64: 2, 3, 32, 32>}, {transform_indices = @transform_2, window_bounds = array<i64: 2, 3, 32, 32>}, {pipeline_mode = #tpu.pipeline_mode<synchronous>, transform_indices = @transform_3, window_bounds = array<i64: 24, 96>}, {pipeline_mode = #tpu.pipeline_mode<synchronous>, transform_indices = @transform_4, window_bounds = array<i64: 3, 64, 16>}, {transform_indices = @transform_5, window_bounds = array<i64: 2, 64>}]} {
    %c0 = arith.constant 0 : index
    %c0_0 = arith.constant 0 : index
    %c0_1 = arith.constant 0 : index
    %c0_2 = arith.constant 0 : index
    %0 = vector.load %arg1[%c0, %c0_0, %c0_1, %c0_2] : memref<2x3x32x32xf32, #tpu.memory_space<vmem>>, vector<2x3x32x32xf32>
    %c0_3 = arith.constant 0 : index
    %c0_4 = arith.constant 0 : index
    %c0_5 = arith.constant 0 : index
    %c0_6 = arith.constant 0 : index
    %1 = vector.load %arg2[%c0_3, %c0_4, %c0_5, %c0_6] : memref<2x3x32x32xf32, #tpu.memory_space<vmem>>, vector<2x3x32x32xf32>
    %c0_7 = arith.constant 0 : index
    %c0_8 = arith.constant 0 : index
    %c0_9 = arith.constant 0 : index
    %c0_10 = arith.constant 0 : index
    %2 = vector.load %arg3[%c0_7, %c0_8, %c0_9, %c0_10] : memref<2x3x32x32xf32, #tpu.memory_space<vmem>>, vector<2x3x32x32xf32>
    %3 = arith.subf %0, %1 : vector<2x3x32x32xf32>
    %4 = vector.shape_cast %3 : vector<2x3x32x32xf32> to vector<2x96x32xf32>
    %5 = arith.subf %1, %2 : vector<2x3x32x32xf32>
    %6 = vector.shape_cast %5 : vector<2x3x32x32xf32> to vector<2x96x32xf32>
    %7 = vector.extract_strided_slice %4 {offsets = [0, 0, 0], sizes = [1, 96, 32], strides = [1, 1, 1]} : vector<2x96x32xf32> to vector<1x96x32xf32>
    %8 = vector.shape_cast %7 : vector<1x96x32xf32> to vector<96x32xf32>
    %9 = vector.extract_strided_slice %6 {offsets = [0, 0, 0], sizes = [1, 96, 32], strides = [1, 1, 1]} : vector<2x96x32xf32> to vector<1x96x32xf32>
    %10 = vector.shape_cast %9 : vector<1x96x32xf32> to vector<96x32xf32>
    %11 = vector.extract_strided_slice %4 {offsets = [1, 0, 0], sizes = [1, 96, 32], strides = [1, 1, 1]} : vector<2x96x32xf32> to vector<1x96x32xf32>
    %12 = vector.shape_cast %11 : vector<1x96x32xf32> to vector<96x32xf32>
    %13 = vector.extract_strided_slice %6 {offsets = [1, 0, 0], sizes = [1, 96, 32], strides = [1, 1, 1]} : vector<2x96x32xf32> to vector<1x96x32xf32>
    %14 = vector.shape_cast %13 : vector<1x96x32xf32> to vector<96x32xf32>
    %15 = tpu.concatenate %8, %10, %12, %14 in 1 : vector<96x32xf32>, vector<96x32xf32>, vector<96x32xf32>, vector<96x32xf32> -> vector<96x128xf32>
    %16 = arith.truncf %15 : vector<96x128xf32> to vector<96x128xbf16>
    %c0_11 = arith.constant 0 : index
    %c0_12 = arith.constant 0 : index
    %17 = vector.load %arg4[%c0_11, %c0_12] : memref<24x96xbf16, #tpu.memory_space<vmem>>, vector<24x96xbf16>
    %cst = arith.constant dense<0.000000e+00> : vector<24x128xf32>
    %18 = tpu.matmul %17, %16, %cst {dimension_numbers = #tpu.dot_dimension_numbers<[1], [0], [0], [1], [0, 0, 1, 1], [], []>} : vector<24x96xbf16>, vector<96x128xbf16>, vector<24x128xf32> -> vector<24x128xf32>
    %19 = vector.extract_strided_slice %18 {offsets = [0, 0], sizes = [24, 64], strides = [1, 1]} : vector<24x128xf32> to vector<24x64xf32>
    %cst_13 = arith.constant 0.000000e+00 : f32
    %20 = vector.broadcast %cst_13 : f32 to vector<8x16xf32>
    %21 = vector.extract_strided_slice %19 {offsets = [0, 0], sizes = [8, 64], strides = [1, 1]} : vector<24x64xf32> to vector<8x64xf32>
    %c0_14 = arith.constant 0 : index
    %c0_15 = arith.constant 0 : index
    %c0_16 = arith.constant 0 : index
    %22 = vector.load %arg5[%c0_14, %c0_15, %c0_16] : memref<3x64x16xf32, #tpu.memory_space<vmem>>, vector<1x64x16xf32>
    %23 = vector.shape_cast %22 : vector<1x64x16xf32> to vector<64x16xf32>
    %cst_17 = arith.constant dense<0.000000e+00> : vector<8x16xf32>
    %24 = tpu.matmul %21, %23, %cst_17 {dimension_numbers = #tpu.dot_dimension_numbers<[1], [0], [0], [1], [0, 0, 1, 1], [], []>} : vector<8x64xf32>, vector<64x16xf32>, vector<8x16xf32> -> vector<8x16xf32>
    %25 = arith.addf %20, %24 : vector<8x16xf32>
    %26 = vector.extract_strided_slice %19 {offsets = [8, 0], sizes = [8, 64], strides = [1, 1]} : vector<24x64xf32> to vector<8x64xf32>
    %c1 = arith.constant 1 : index
    %c0_18 = arith.constant 0 : index
    %c0_19 = arith.constant 0 : index
    %27 = vector.load %arg5[%c1, %c0_18, %c0_19] : memref<3x64x16xf32, #tpu.memory_space<vmem>>, vector<1x64x16xf32>
    %28 = vector.shape_cast %27 : vector<1x64x16xf32> to vector<64x16xf32>
    %cst_20 = arith.constant dense<0.000000e+00> : vector<8x16xf32>
    %29 = tpu.matmul %26, %28, %cst_20 {dimension_numbers = #tpu.dot_dimension_numbers<[1], [0], [0], [1], [0, 0, 1, 1], [], []>} : vector<8x64xf32>, vector<64x16xf32>, vector<8x16xf32> -> vector<8x16xf32>
    %30 = arith.addf %25, %29 : vector<8x16xf32>
    %31 = vector.extract_strided_slice %19 {offsets = [16, 0], sizes = [8, 64], strides = [1, 1]} : vector<24x64xf32> to vector<8x64xf32>
    %c2 = arith.constant 2 : index
    %c0_21 = arith.constant 0 : index
    %c0_22 = arith.constant 0 : index
    %32 = vector.load %arg5[%c2, %c0_21, %c0_22] : memref<3x64x16xf32, #tpu.memory_space<vmem>>, vector<1x64x16xf32>
    %33 = vector.shape_cast %32 : vector<1x64x16xf32> to vector<64x16xf32>
    %cst_23 = arith.constant dense<0.000000e+00> : vector<8x16xf32>
    %34 = tpu.matmul %31, %33, %cst_23 {dimension_numbers = #tpu.dot_dimension_numbers<[1], [0], [0], [1], [0, 0, 1, 1], [], []>} : vector<8x64xf32>, vector<64x16xf32>, vector<8x16xf32> -> vector<8x16xf32>
    %35 = arith.addf %30, %34 : vector<8x16xf32>
    %36 = vector.extract_strided_slice %35 {offsets = [0, 0], sizes = [8, 8], strides = [1, 1]} : vector<8x16xf32> to vector<8x8xf32>
    %37 = math.absf %36 : vector<8x8xf32>
    %38 = vector.extract_strided_slice %35 {offsets = [0, 8], sizes = [8, 8], strides = [1, 1]} : vector<8x16xf32> to vector<8x8xf32>
    %39 = math.absf %38 : vector<8x8xf32>
    %40 = arith.addf %37, %39 : vector<8x8xf32>
    %cst_24 = arith.constant 5.000000e-01 : f32
    %41 = vector.broadcast %cst_24 : f32 to vector<8x8xf32>
    %42 = arith.mulf %41, %40 : vector<8x8xf32>
    %cst_25 = arith.constant dense<0xFF800000> : vector<8xf32>
    %43 = vector.multi_reduction <maximumf>, %42, %cst_25 [1] : vector<8x8xf32> to vector<8xf32>
    %44 = vector.shape_cast %43 : vector<8xf32> to vector<8x1xf32>
    %cst_26 = arith.constant dense<0xFF800000> : vector<1xf32>
    %45 = vector.multi_reduction <maximumf>, %44, %cst_26 [0] : vector<8x1xf32> to vector<1xf32>
    %46 = vector.shape_cast %45 : vector<1xf32> to vector<1x1xf32>
    %cst_27 = arith.constant dense<0x7F800000> : vector<8xf32>
    %47 = vector.multi_reduction <minimumf>, %42, %cst_27 [1] : vector<8x8xf32> to vector<8xf32>
    %48 = vector.shape_cast %47 : vector<8xf32> to vector<8x1xf32>
    %cst_28 = arith.constant dense<0x7F800000> : vector<1xf32>
    %49 = vector.multi_reduction <minimumf>, %48, %cst_28 [0] : vector<8x1xf32> to vector<1xf32>
    %50 = vector.shape_cast %49 : vector<1xf32> to vector<1x1xf32>
    %51 = arith.subf %46, %50 : vector<1x1xf32>
    %cst_29 = arith.constant 9.99999997E-7 : f32
    %52 = vector.broadcast %cst_29 : f32 to vector<1x1xf32>
    %53 = arith.addf %51, %52 : vector<1x1xf32>
    %54 = tpu.reciprocal %53 {approx = true} : vector<1x1xf32> -> vector<1x1xf32>
    %55 = vector.broadcast %50 : vector<1x1xf32> to vector<8x8xf32>
    %56 = arith.subf %42, %55 : vector<8x8xf32>
    %57 = vector.broadcast %54 : vector<1x1xf32> to vector<8x8xf32>
    %58 = arith.mulf %56, %57 : vector<8x8xf32>
    %59 = vector.extract_strided_slice %58 {offsets = [0, 0], sizes = [1, 8], strides = [1, 1]} : vector<8x8xf32> to vector<1x8xf32>
    %60 = vector.extract_strided_slice %58 {offsets = [1, 0], sizes = [1, 8], strides = [1, 1]} : vector<8x8xf32> to vector<1x8xf32>
    %61 = vector.extract_strided_slice %58 {offsets = [2, 0], sizes = [1, 8], strides = [1, 1]} : vector<8x8xf32> to vector<1x8xf32>
    %62 = vector.extract_strided_slice %58 {offsets = [3, 0], sizes = [1, 8], strides = [1, 1]} : vector<8x8xf32> to vector<1x8xf32>
    %63 = vector.extract_strided_slice %58 {offsets = [4, 0], sizes = [1, 8], strides = [1, 1]} : vector<8x8xf32> to vector<1x8xf32>
    %64 = vector.extract_strided_slice %58 {offsets = [5, 0], sizes = [1, 8], strides = [1, 1]} : vector<8x8xf32> to vector<1x8xf32>
    %65 = vector.extract_strided_slice %58 {offsets = [6, 0], sizes = [1, 8], strides = [1, 1]} : vector<8x8xf32> to vector<1x8xf32>
    %66 = vector.extract_strided_slice %58 {offsets = [7, 0], sizes = [1, 8], strides = [1, 1]} : vector<8x8xf32> to vector<1x8xf32>
    %67 = tpu.concatenate %59, %60, %61, %62, %63, %64, %65, %66 in 1 : vector<1x8xf32>, vector<1x8xf32>, vector<1x8xf32>, vector<1x8xf32>, vector<1x8xf32>, vector<1x8xf32>, vector<1x8xf32>, vector<1x8xf32> -> vector<1x64xf32>
    %68 = vector.extract_strided_slice %18 {offsets = [0, 64], sizes = [24, 64], strides = [1, 1]} : vector<24x128xf32> to vector<24x64xf32>
    %cst_30 = arith.constant 0.000000e+00 : f32
    %69 = vector.broadcast %cst_30 : f32 to vector<8x16xf32>
    %70 = vector.extract_strided_slice %68 {offsets = [0, 0], sizes = [8, 64], strides = [1, 1]} : vector<24x64xf32> to vector<8x64xf32>
    %c0_31 = arith.constant 0 : index
    %c0_32 = arith.constant 0 : index
    %c0_33 = arith.constant 0 : index
    %71 = vector.load %arg5[%c0_31, %c0_32, %c0_33] : memref<3x64x16xf32, #tpu.memory_space<vmem>>, vector<1x64x16xf32>
    %72 = vector.shape_cast %71 : vector<1x64x16xf32> to vector<64x16xf32>
    %cst_34 = arith.constant dense<0.000000e+00> : vector<8x16xf32>
    %73 = tpu.matmul %70, %72, %cst_34 {dimension_numbers = #tpu.dot_dimension_numbers<[1], [0], [0], [1], [0, 0, 1, 1], [], []>} : vector<8x64xf32>, vector<64x16xf32>, vector<8x16xf32> -> vector<8x16xf32>
    %74 = arith.addf %69, %73 : vector<8x16xf32>
    %75 = vector.extract_strided_slice %68 {offsets = [8, 0], sizes = [8, 64], strides = [1, 1]} : vector<24x64xf32> to vector<8x64xf32>
    %c1_35 = arith.constant 1 : index
    %c0_36 = arith.constant 0 : index
    %c0_37 = arith.constant 0 : index
    %76 = vector.load %arg5[%c1_35, %c0_36, %c0_37] : memref<3x64x16xf32, #tpu.memory_space<vmem>>, vector<1x64x16xf32>
    %77 = vector.shape_cast %76 : vector<1x64x16xf32> to vector<64x16xf32>
    %cst_38 = arith.constant dense<0.000000e+00> : vector<8x16xf32>
    %78 = tpu.matmul %75, %77, %cst_38 {dimension_numbers = #tpu.dot_dimension_numbers<[1], [0], [0], [1], [0, 0, 1, 1], [], []>} : vector<8x64xf32>, vector<64x16xf32>, vector<8x16xf32> -> vector<8x16xf32>
    %79 = arith.addf %74, %78 : vector<8x16xf32>
    %80 = vector.extract_strided_slice %68 {offsets = [16, 0], sizes = [8, 64], strides = [1, 1]} : vector<24x64xf32> to vector<8x64xf32>
    %c2_39 = arith.constant 2 : index
    %c0_40 = arith.constant 0 : index
    %c0_41 = arith.constant 0 : index
    %81 = vector.load %arg5[%c2_39, %c0_40, %c0_41] : memref<3x64x16xf32, #tpu.memory_space<vmem>>, vector<1x64x16xf32>
    %82 = vector.shape_cast %81 : vector<1x64x16xf32> to vector<64x16xf32>
    %cst_42 = arith.constant dense<0.000000e+00> : vector<8x16xf32>
    %83 = tpu.matmul %80, %82, %cst_42 {dimension_numbers = #tpu.dot_dimension_numbers<[1], [0], [0], [1], [0, 0, 1, 1], [], []>} : vector<8x64xf32>, vector<64x16xf32>, vector<8x16xf32> -> vector<8x16xf32>
    %84 = arith.addf %79, %83 : vector<8x16xf32>
    %85 = vector.extract_strided_slice %84 {offsets = [0, 0], sizes = [8, 8], strides = [1, 1]} : vector<8x16xf32> to vector<8x8xf32>
    %86 = math.absf %85 : vector<8x8xf32>
    %87 = vector.extract_strided_slice %84 {offsets = [0, 8], sizes = [8, 8], strides = [1, 1]} : vector<8x16xf32> to vector<8x8xf32>
    %88 = math.absf %87 : vector<8x8xf32>
    %89 = arith.addf %86, %88 : vector<8x8xf32>
    %cst_43 = arith.constant 5.000000e-01 : f32
    %90 = vector.broadcast %cst_43 : f32 to vector<8x8xf32>
    %91 = arith.mulf %90, %89 : vector<8x8xf32>
    %cst_44 = arith.constant dense<0xFF800000> : vector<8xf32>
    %92 = vector.multi_reduction <maximumf>, %91, %cst_44 [1] : vector<8x8xf32> to vector<8xf32>
    %93 = vector.shape_cast %92 : vector<8xf32> to vector<8x1xf32>
    %cst_45 = arith.constant dense<0xFF800000> : vector<1xf32>
    %94 = vector.multi_reduction <maximumf>, %93, %cst_45 [0] : vector<8x1xf32> to vector<1xf32>
    %95 = vector.shape_cast %94 : vector<1xf32> to vector<1x1xf32>
    %cst_46 = arith.constant dense<0x7F800000> : vector<8xf32>
    %96 = vector.multi_reduction <minimumf>, %91, %cst_46 [1] : vector<8x8xf32> to vector<8xf32>
    %97 = vector.shape_cast %96 : vector<8xf32> to vector<8x1xf32>
    %cst_47 = arith.constant dense<0x7F800000> : vector<1xf32>
    %98 = vector.multi_reduction <minimumf>, %97, %cst_47 [0] : vector<8x1xf32> to vector<1xf32>
    %99 = vector.shape_cast %98 : vector<1xf32> to vector<1x1xf32>
    %100 = arith.subf %95, %99 : vector<1x1xf32>
    %cst_48 = arith.constant 9.99999997E-7 : f32
    %101 = vector.broadcast %cst_48 : f32 to vector<1x1xf32>
    %102 = arith.addf %100, %101 : vector<1x1xf32>
    %103 = tpu.reciprocal %102 {approx = true} : vector<1x1xf32> -> vector<1x1xf32>
    %104 = vector.broadcast %99 : vector<1x1xf32> to vector<8x8xf32>
    %105 = arith.subf %91, %104 : vector<8x8xf32>
    %106 = vector.broadcast %103 : vector<1x1xf32> to vector<8x8xf32>
    %107 = arith.mulf %105, %106 : vector<8x8xf32>
    %108 = vector.extract_strided_slice %107 {offsets = [0, 0], sizes = [1, 8], strides = [1, 1]} : vector<8x8xf32> to vector<1x8xf32>
    %109 = vector.extract_strided_slice %107 {offsets = [1, 0], sizes = [1, 8], strides = [1, 1]} : vector<8x8xf32> to vector<1x8xf32>
    %110 = vector.extract_strided_slice %107 {offsets = [2, 0], sizes = [1, 8], strides = [1, 1]} : vector<8x8xf32> to vector<1x8xf32>
    %111 = vector.extract_strided_slice %107 {offsets = [3, 0], sizes = [1, 8], strides = [1, 1]} : vector<8x8xf32> to vector<1x8xf32>
    %112 = vector.extract_strided_slice %107 {offsets = [4, 0], sizes = [1, 8], strides = [1, 1]} : vector<8x8xf32> to vector<1x8xf32>
    %113 = vector.extract_strided_slice %107 {offsets = [5, 0], sizes = [1, 8], strides = [1, 1]} : vector<8x8xf32> to vector<1x8xf32>
    %114 = vector.extract_strided_slice %107 {offsets = [6, 0], sizes = [1, 8], strides = [1, 1]} : vector<8x8xf32> to vector<1x8xf32>
    %115 = vector.extract_strided_slice %107 {offsets = [7, 0], sizes = [1, 8], strides = [1, 1]} : vector<8x8xf32> to vector<1x8xf32>
    %116 = tpu.concatenate %108, %109, %110, %111, %112, %113, %114, %115 in 1 : vector<1x8xf32>, vector<1x8xf32>, vector<1x8xf32>, vector<1x8xf32>, vector<1x8xf32>, vector<1x8xf32>, vector<1x8xf32>, vector<1x8xf32> -> vector<1x64xf32>
    %117 = tpu.concatenate %67, %116 in 0 : vector<1x64xf32>, vector<1x64xf32> -> vector<2x64xf32>
    %c0_49 = arith.constant 0 : index
    %c0_50 = arith.constant 0 : index
    %118 = vector.load %arg6[%c0_49, %c0_50] : memref<2x64xf32, #tpu.memory_space<vmem>>, vector<2x64xf32>
    tpu.vector_store %arg6[%c0_49, %c0_50], %117 {strides = array<i32>} : memref<2x64xf32, #tpu.memory_space<vmem>>, vector<2x64xf32>,
    return
  }
  func.func @transform_0(%arg0: i32) -> (i32, i32, i32, i32) {
    %c0_i32 = arith.constant 0 : i32
    %c0_i32_0 = arith.constant 0 : i32
    %c0_i32_1 = arith.constant 0 : i32
    %c0_i32_2 = arith.constant 0 : i32
    return %arg0, %c0_i32, %c0_i32_0, %c0_i32_1 : i32, i32, i32, i32
  }
  func.func @transform_1(%arg0: i32) -> (i32, i32, i32, i32) {
    %c0_i32 = arith.constant 0 : i32
    %c0_i32_0 = arith.constant 0 : i32
    %c0_i32_1 = arith.constant 0 : i32
    %c0_i32_2 = arith.constant 0 : i32
    return %arg0, %c0_i32, %c0_i32_0, %c0_i32_1 : i32, i32, i32, i32
  }
  func.func @transform_2(%arg0: i32) -> (i32, i32, i32, i32) {
    %c0_i32 = arith.constant 0 : i32
    %c0_i32_0 = arith.constant 0 : i32
    %c0_i32_1 = arith.constant 0 : i32
    %c0_i32_2 = arith.constant 0 : i32
    return %arg0, %c0_i32, %c0_i32_0, %c0_i32_1 : i32, i32, i32, i32
  }
  func.func @transform_3(%arg0: i32) -> (i32, i32) {
    %c0_i32 = arith.constant 0 : i32
    %c0_i32_0 = arith.constant 0 : i32
    %c0_i32_1 = arith.constant 0 : i32
    return %c0_i32, %c0_i32_0 : i32, i32
  }
  func.func @transform_4(%arg0: i32) -> (i32, i32, i32) {
    %c0_i32 = arith.constant 0 : i32
    %c0_i32_0 = arith.constant 0 : i32
    %c0_i32_1 = arith.constant 0 : i32
    %c0_i32_2 = arith.constant 0 : i32
    return %c0_i32, %c0_i32_0, %c0_i32_1 : i32, i32, i32
  }
  func.func @transform_5(%arg0: i32) -> (i32, i32) {
    %c0_i32 = arith.constant 0 : i32
    %c0_i32_0 = arith.constant 0 : i32
    return %arg0, %c0_i32 : i32, i32
  }
}

</mosaic_0001>

<llo_original>
// kernel: forward.1
$region0: #{forward.1}
  #allocation0 [shape = 'u32[]', space=smem, size = 0x4, offset = 0x4, fixed_abs, tag = 'smem constant byte address 0x4 - core index']
  #allocation1 [shape = 'u32[144,128]{1,0:T(1,128)}', space=vmem, size = 0x12000, scoped, tag = 'internal scratch']
  %s0 = inlined_call_operand.vmem [shape: f32[2,3,32,32], index: 0, kind: input, shape index: {}]
  %s1 = inlined_call_operand.vmem [shape: f32[2,3,32,32], index: 1, kind: input, shape index: {}]
  %s2 = inlined_call_operand.vmem [shape: f32[2,3,32,32], index: 2, kind: input, shape index: {}]
  %s3 = inlined_call_operand.vmem [shape: bf16[24,96], index: 3, kind: input, shape index: {}]
  %s4 = inlined_call_operand.vmem [shape: f32[3,64,16], index: 4, kind: input, shape index: {}]
  %s5 = inlined_call_operand.vmem [shape: f32[2,64], index: 5, kind: output, shape index: {}]
  %s6 = sld [smem:[#allocation0]]
  $region30: #{forward.1} parent=0
    _
  %s8 = ssub.s32 1, %s6
  %s9 = scalar_select 0, %s8, %s6
  // Predicated region
  $region2: #{forward.1} parent=0 // pred_check
    _
  $region3: #{forward.1} parent=0 // pred_check_branch
    %11 = sbr.rel (0) target = $region5
  $region4: #{forward.1} parent=0 // pred_region
    _
  $region5: #{forward.1} parent=0 // pred_fallthru
    _
  // Predicated region
  $region6: #{forward.1} parent=0 // pred_check
    _
  $region7: #{forward.1} parent=0 // pred_check_branch
    %13 = sbr.rel (0) target = $region9
  $region8: #{forward.1} parent=0 // pred_region
    _
  $region9: #{forward.1} parent=0 // pred_fallthru
    _
  // Predicated region
  $region10: #{forward.1} parent=0 // pred_check
    _
  $region11: #{forward.1} parent=0 // pred_check_branch
    %15 = sbr.rel (0) target = $region13
  $region12: #{forward.1} parent=0 // pred_region
    _
  $region13: #{forward.1} parent=0 // pred_fallthru
    _
  // Predicated region
  $region14: #{forward.1} parent=0 // pred_check
    _
  $region15: #{forward.1} parent=0 // pred_check_branch
    %17 = sbr.rel (0) target = $region17
  $region16: #{forward.1} parent=0 // pred_region
    _
  $region17: #{forward.1} parent=0 // pred_fallthru
    _
  // Predicated region
  $region18: #{forward.1} parent=0 // pred_check
    _
  $region19: #{forward.1} parent=0 // pred_check_branch
    %19 = sbr.rel (0) target = $region21
  $region20: #{forward.1} parent=0 // pred_region
    _
  $region21: #{forward.1} parent=0 // pred_fallthru
    _
  %v21 = vld [vmem:[%s0] sm:$0xff]
  %v22 = vld [vmem:[%s0 + $0x8] sm:$0xff]
  %v23 = vld [vmem:[%s0 + $0x10] sm:$0xff]
  %v24 = vld [vmem:[%s0 + $0x18] sm:$0xff]
  %v25 = vld [vmem:[%s0 + $0x20] sm:$0xff]
  %v26 = vld [vmem:[%s0 + $0x28] sm:$0xff]
  %v27 = vld [vmem:[%s0 + $0x30] sm:$0xff]
  %v28 = vld [vmem:[%s0 + $0x38] sm:$0xff]
  %v29 = vld [vmem:[%s0 + $0x40] sm:$0xff]
  %v30 = vld [vmem:[%s0 + $0x48] sm:$0xff]
  %v31 = vld [vmem:[%s0 + $0x50] sm:$0xff]
  %v32 = vld [vmem:[%s0 + $0x58] sm:$0xff]
  %v33 = vld [vmem:[%s0 + $0x60] sm:$0xff]
  %v34 = vld [vmem:[%s0 + $0x68] sm:$0xff]
  %v35 = vld [vmem:[%s0 + $0x70] sm:$0xff]
  %v36 = vld [vmem:[%s0 + $0x78] sm:$0xff]
  %v37 = vld [vmem:[%s0 + $0x80] sm:$0xff]
  %v38 = vld [vmem:[%s0 + $0x88] sm:$0xff]
  %v39 = vld [vmem:[%s0 + $0x90] sm:$0xff]
  %v40 = vld [vmem:[%s0 + $0x98] sm:$0xff]
  %v41 = vld [vmem:[%s0 + $0xa0] sm:$0xff]
  %v42 = vld [vmem:[%s0 + $0xa8] sm:$0xff]
  %v43 = vld [vmem:[%s0 + $0xb0] sm:$0xff]
  %v44 = vld [vmem:[%s0 + $0xb8] sm:$0xff]
  %v45 = vld [vmem:[%s1] sm:$0xff]
  %v46 = vld [vmem:[%s1 + $0x8] sm:$0xff]
  %v47 = vld [vmem:[%s1 + $0x10] sm:$0xff]
  %v48 = vld [vmem:[%s1 + $0x18] sm:$0xff]
  %v49 = vld [vmem:[%s1 + $0x20] sm:$0xff]
  %v50 = vld [vmem:[%s1 + $0x28] sm:$0xff]
  %v51 = vld [vmem:[%s1 + $0x30] sm:$0xff]
  %v52 = vld [vmem:[%s1 + $0x38] sm:$0xff]
  %v53 = vld [vmem:[%s1 + $0x40] sm:$0xff]
  %v54 = vld [vmem:[%s1 + $0x48] sm:$0xff]
  %v55 = vld [vmem:[%s1 + $0x50] sm:$0xff]
  %v56 = vld [vmem:[%s1 + $0x58] sm:$0xff]
  %v57 = vld [vmem:[%s1 + $0x60] sm:$0xff]
  %v58 = vld [vmem:[%s1 + $0x68] sm:$0xff]
  %v59 = vld [vmem:[%s1 + $0x70] sm:$0xff]
  %v60 = vld [vmem:[%s1 + $0x78] sm:$0xff]
  %v61 = vld [vmem:[%s1 + $0x80] sm:$0xff]
  %v62 = vld [vmem:[%s1 + $0x88] sm:$0xff]
  %v63 = vld [vmem:[%s1 + $0x90] sm:$0xff]
  %v64 = vld [vmem:[%s1 + $0x98] sm:$0xff]
  %v65 = vld [vmem:[%s1 + $0xa0] sm:$0xff]
  %v66 = vld [vmem:[%s1 + $0xa8] sm:$0xff]
  %v67 = vld [vmem:[%s1 + $0xb0] sm:$0xff]
  %v68 = vld [vmem:[%s1 + $0xb8] sm:$0xff]
  %v69 = vld [vmem:[%s2] sm:$0xff]
  %v70 = vld [vmem:[%s2 + $0x8] sm:$0xff]
  %v71 = vld [vmem:[%s2 + $0x10] sm:$0xff]
  %v72 = vld [vmem:[%s2 + $0x18] sm:$0xff]
  %v73 = vld [vmem:[%s2 + $0x20] sm:$0xff]
  %v74 = vld [vmem:[%s2 + $0x28] sm:$0xff]
  %v75 = vld [vmem:[%s2 + $0x30] sm:$0xff]
  %v76 = vld [vmem:[%s2 + $0x38] sm:$0xff]
  %v77 = vld [vmem:[%s2 + $0x40] sm:$0xff]
  %v78 = vld [vmem:[%s2 + $0x48] sm:$0xff]
  %v79 = vld [vmem:[%s2 + $0x50] sm:$0xff]
  %v80 = vld [vmem:[%s2 + $0x58] sm:$0xff]
  %v81 = vld [vmem:[%s2 + $0x60] sm:$0xff]
  %v82 = vld [vmem:[%s2 + $0x68] sm:$0xff]
  %v83 = vld [vmem:[%s2 + $0x70] sm:$0xff]
  %v84 = vld [vmem:[%s2 + $0x78] sm:$0xff]
  %v85 = vld [vmem:[%s2 + $0x80] sm:$0xff]
  %v86 = vld [vmem:[%s2 + $0x88] sm:$0xff]
  %v87 = vld [vmem:[%s2 + $0x90] sm:$0xff]
  %v88 = vld [vmem:[%s2 + $0x98] sm:$0xff]
  %v89 = vld [vmem:[%s2 + $0xa0] sm:$0xff]
  %v90 = vld [vmem:[%s2 + $0xa8] sm:$0xff]
  %v91 = vld [vmem:[%s2 + $0xb0] sm:$0xff]
  %v92 = vld [vmem:[%s2 + $0xb8] sm:$0xff]
  %v93 = vsub.f32 %v21, %v45
  %v94 = vsub.f32 %v22, %v46
  %v95 = vsub.f32 %v23, %v47
  %v96 = vsub.f32 %v24, %v48
  %v97 = vsub.f32 %v25, %v49
  %v98 = vsub.f32 %v26, %v50
  %v99 = vsub.f32 %v27, %v51
  %v100 = vsub.f32 %v28, %v52
  %v101 = vsub.f32 %v29, %v53
  %v102 = vsub.f32 %v30, %v54
  %v103 = vsub.f32 %v31, %v55
  %v104 = vsub.f32 %v32, %v56
  %v105 = vsub.f32 %v33, %v57
  %v106 = vsub.f32 %v34, %v58
  %v107 = vsub.f32 %v35, %v59
  %v108 = vsub.f32 %v36, %v60
  %v109 = vsub.f32 %v37, %v61
  %v110 = vsub.f32 %v38, %v62
  %v111 = vsub.f32 %v39, %v63
  %v112 = vsub.f32 %v40, %v64
  %v113 = vsub.f32 %v41, %v65
  %v114 = vsub.f32 %v42, %v66
  %v115 = vsub.f32 %v43, %v67
  %v116 = vsub.f32 %v44, %v68
  %v117 = vsub.f32 %v45, %v69
  %v118 = vsub.f32 %v46, %v70
  %v119 = vsub.f32 %v47, %v71
  %v120 = vsub.f32 %v48, %v72
  %v121 = vsub.f32 %v49, %v73
  %v122 = vsub.f32 %v50, %v74
  %v123 = vsub.f32 %v51, %v75
  %v124 = vsub.f32 %v52, %v76
  %v125 = vsub.f32 %v53, %v77
  %v126 = vsub.f32 %v54, %v78
  %v127 = vsub.f32 %v55, %v79
  %v128 = vsub.f32 %v56, %v80
  %v129 = vsub.f32 %v57, %v81
  %v130 = vsub.f32 %v58, %v82
  %v131 = vsub.f32 %v59, %v83
  %v132 = vsub.f32 %v60, %v84
  %v133 = vsub.f32 %v61, %v85
  %v134 = vsub.f32 %v62, %v86
  %v135 = vsub.f32 %v63, %v87
  %v136 = vsub.f32 %v64, %v88
  %v137 = vsub.f32 %v65, %v89
  %v138 = vsub.f32 %v66, %v90
  %v139 = vsub.f32 %v67, %v91
  %v140 = vsub.f32 %v68, %v92
  %153 = vrot.lane.b32.xlu0 %v117, 32
  %v154 = vpop.permute.xlu0 %153
  %155 = vrot.lane.b32.xlu0 %v118, 32
  %v156 = vpop.permute.xlu0 %155
  %157 = vrot.lane.b32.xlu0 %v119, 32
  %v158 = vpop.permute.xlu0 %157
  %159 = vrot.lane.b32.xlu0 %v120, 32
  %v160 = vpop.permute.xlu0 %159
  %161 = vrot.lane.b32.xlu0 %v121, 32
  %v162 = vpop.permute.xlu0 %161
  %163 = vrot.lane.b32.xlu0 %v122, 32
  %v164 = vpop.permute.xlu0 %163
  %165 = vrot.lane.b32.xlu0 %v123, 32
  %v166 = vpop.permute.xlu0 %165
  %167 = vrot.lane.b32.xlu0 %v124, 32
  %v168 = vpop.permute.xlu0 %167
  %169 = vrot.lane.b32.xlu0 %v125, 32
  %v170 = vpop.permute.xlu0 %169
  %171 = vrot.lane.b32.xlu0 %v126, 32
  %v172 = vpop.permute.xlu0 %171
  %173 = vrot.lane.b32.xlu0 %v127, 32
  %v174 = vpop.permute.xlu0 %173
  %175 = vrot.lane.b32.xlu0 %v128, 32
  %v176 = vpop.permute.xlu0 %175
  %201 = vrot.lane.b32.xlu0 %v105, 64
  %v202 = vpop.permute.xlu0 %201
  %203 = vrot.lane.b32.xlu0 %v106, 64
  %v204 = vpop.permute.xlu0 %203
  %205 = vrot.lane.b32.xlu0 %v107, 64
  %v206 = vpop.permute.xlu0 %205
  %207 = vrot.lane.b32.xlu0 %v108, 64
  %v208 = vpop.permute.xlu0 %207
  %209 = vrot.lane.b32.xlu0 %v109, 64
  %v210 = vpop.permute.xlu0 %209
  %211 = vrot.lane.b32.xlu0 %v110, 64
  %v212 = vpop.permute.xlu0 %211
  %213 = vrot.lane.b32.xlu0 %v111, 64
  %v214 = vpop.permute.xlu0 %213
  %215 = vrot.lane.b32.xlu0 %v112, 64
  %v216 = vpop.permute.xlu0 %215
  %217 = vrot.lane.b32.xlu0 %v113, 64
  %v218 = vpop.permute.xlu0 %217
  %219 = vrot.lane.b32.xlu0 %v114, 64
  %v220 = vpop.permute.xlu0 %219
  %221 = vrot.lane.b32.xlu0 %v115, 64
  %v222 = vpop.permute.xlu0 %221
  %223 = vrot.lane.b32.xlu0 %v116, 64
  %v224 = vpop.permute.xlu0 %223
  %249 = vrot.lane.b32.xlu0 %v129, 96
  %v250 = vpop.permute.xlu0 %249
  %251 = vrot.lane.b32.xlu0 %v130, 96
  %v252 = vpop.permute.xlu0 %251
  %253 = vrot.lane.b32.xlu0 %v131, 96
  %v254 = vpop.permute.xlu0 %253
  %255 = vrot.lane.b32.xlu0 %v132, 96
  %v256 = vpop.permute.xlu0 %255
  %257 = vrot.lane.b32.xlu0 %v133, 96
  %v258 = vpop.permute.xlu0 %257
  %259 = vrot.lane.b32.xlu0 %v134, 96
  %v260 = vpop.permute.xlu0 %259
  %261 = vrot.lane.b32.xlu0 %v135, 96
  %v262 = vpop.permute.xlu0 %261
  %263 = vrot.lane.b32.xlu0 %v136, 96
  %v264 = vpop.permute.xlu0 %263
  %265 = vrot.lane.b32.xlu0 %v137, 96
  %v266 = vpop.permute.xlu0 %265
  %267 = vrot.lane.b32.xlu0 %v138, 96
  %v268 = vpop.permute.xlu0 %267
  %269 = vrot.lane.b32.xlu0 %v139, 96
  %v270 = vpop.permute.xlu0 %269
  %271 = vrot.lane.b32.xlu0 %v140, 96
  %v272 = vpop.permute.xlu0 %271
  %vm285 = vcmask 261120
  %v286 = vsel %vm285, %v93, %v154
  %v287 = vsel %vm285, %v94, %v156
  %v288 = vsel %vm285, %v95, %v158
  %v289 = vsel %vm285, %v96, %v160
  %v290 = vsel %vm285, %v97, %v162
  %v291 = vsel %vm285, %v98, %v164
  %v292 = vsel %vm285, %v99, %v166
  %v293 = vsel %vm285, %v100, %v168
  %v294 = vsel %vm285, %v101, %v170
  %v295 = vsel %vm285, %v102, %v172
  %v296 = vsel %vm285, %v103, %v174
  %v297 = vsel %vm285, %v104, %v176
  %vm298 = vcmask 523264
  %v299 = vsel %vm298, %v286, %v202
  %v300 = vsel %vm298, %v287, %v204
  %v301 = vsel %vm298, %v288, %v206
  %v302 = vsel %vm298, %v289, %v208
  %v303 = vsel %vm298, %v290, %v210
  %v304 = vsel %vm298, %v291, %v212
  %v305 = vsel %vm298, %v292, %v214
  %v306 = vsel %vm298, %v293, %v216
  %v307 = vsel %vm298, %v294, %v218
  %v308 = vsel %vm298, %v295, %v220
  %v309 = vsel %vm298, %v296, %v222
  %v310 = vsel %vm298, %v297, %v224
  %vm311 = vcmask 785408
  %v312 = vsel %vm311, %v299, %v250
  %v313 = vsel %vm311, %v300, %v252
  %v314 = vsel %vm311, %v301, %v254
  %v315 = vsel %vm311, %v302, %v256
  %v316 = vsel %vm311, %v303, %v258
  %v317 = vsel %vm311, %v304, %v260
  %v318 = vsel %vm311, %v305, %v262
  %v319 = vsel %vm311, %v306, %v264
  %v320 = vsel %vm311, %v307, %v266
  %v321 = vsel %vm311, %v308, %v268
  %v322 = vsel %vm311, %v309, %v270
  %v323 = vsel %vm311, %v310, %v272
  %v324 = vpack.c.bf16 %v313, %v312
  %v325 = vpack.c.bf16 %v315, %v314
  %v326 = vpack.c.bf16 %v317, %v316
  %v327 = vpack.c.bf16 %v319, %v318
  %v328 = vpack.c.bf16 %v321, %v320
  %v329 = vpack.c.bf16 %v323, %v322
  %v330 = vld [vmem:[%s3] sm:$0xf]
  %v331 = vld [vmem:[%s3 + $0x4] sm:$0xf]
  %v332 = vld [vmem:[%s3 + $0x8] sm:$0xf]
  %v336 = vunpack.c.l.b16 %v330
  %v337 = vunpack.c.l.b16 %v331
  %v338 = vunpack.c.l.b16 %v332
  %v339 = vpack.c.b16 %v337, %v336
  %v340 = vpack.c.b16 %v338, %v338
  %v342 = vsel %vm311, %v339, 0
  %v345 = vsel %vm311, %v340, 0
  %347 = vmatprep.subr.bf16.mxu0 0
  %348 = vmatpush1.bf16.msra.mxu0 0
  %349 = vmatprep.subr.bf16.mxu0 0
  %350 = vmatpush1.bf16.msra.mxu0 0
  %351 = vmatprep.subr.bf16.mxu0 0
  %352 = vmatpush1.bf16.msra.mxu0 %v329
  %353 = vmatprep.subr.bf16.mxu0 0
  %354 = vmatpush1.bf16.msra.mxu0 %v328
  %355 = vmatprep.subr.bf16.mxu0 0
  %356 = vmatpush1.bf16.msra.mxu0 %v327
  %357 = vmatprep.subr.bf16.mxu0 0
  %358 = vmatpush1.bf16.msra.mxu0 %v326
  %359 = vmatprep.subr.bf16.mxu0 0
  %360 = vmatpush1.bf16.msra.mxu0 %v325
  %361 = vmatprep.subr.bf16.mxu0 0
  %362 = vmatpush1.bf16.msra.mxu0 %v324
  %363 = vmatprep.subr.bf16.mxu0 0
  %364 = vmatpush2.bf16.msra.mxu0 0
  %365 = vmatprep.subr.bf16.mxu0 0
  %366 = vmatpush2.bf16.msra.mxu0 0
  %367 = vmatprep.subr.bf16.mxu0 0
  %368 = vmatpush2.bf16.msra.mxu0 0
  %369 = vmatprep.subr.bf16.mxu0 0
  %370 = vmatpush2.bf16.msra.mxu0 0
  %371 = vmatprep.subr.bf16.mxu0 0
  %372 = vmatpush2.bf16.msra.mxu0 0
  %373 = vmatprep.subr.bf16.mxu0 0
  %374 = vmatpush2.bf16.msra.mxu0 0
  %375 = vmatprep.subr.bf16.mxu0 0
  %376 = vmatpush2.bf16.msra.mxu0 0
  %377 = vmatprep.subr.bf16.mxu0 0
  %378 = vmatpush2.bf16.msra.mxu0 0
  %379 = vmatprep.mubr.bf16.mxu0 0
  %380 = vmatmul.mubr.bf16.gmra.mxu0 %v342
  %v381 = vpop.f32.mrf.mxu0
  %v382 = vadd.f32 0.0, %v381
  %v383 = vpop.f32.mrf.mxu0
  %v384 = vpop.f32.mrf.mxu0
  %v385 = vadd.f32 0.0, %v384
  %v386 = vpop.f32.mrf.mxu0
  %387 = vmatprep.mubr.bf16.mxu0 0
  %388 = vmatmul.mubr.bf16.gmra.mxu0 %v345
  %v389 = vpop.f32.mrf.mxu0
  %v390 = vadd.f32 0.0, %v389
  %v391 = vpop.f32.mrf.mxu0
  %v392 = vpop.f32.mrf.mxu0
  %v393 = vpop.f32.mrf.mxu0
  %394 = vdwg.mxu0
  %v395 = vld [vmem:[%s4] sm:$0xff]
  %v396 = vld [vmem:[%s4 + $0x8] sm:$0xff]
  %v397 = vld [vmem:[%s4 + $0x10] sm:$0xff]
  %v398 = vld [vmem:[%s4 + $0x18] sm:$0xff]
  %v399 = vld [vmem:[%s4 + $0x20] sm:$0xff]
  %v400 = vld [vmem:[%s4 + $0x28] sm:$0xff]
  %v401 = vld [vmem:[%s4 + $0x30] sm:$0xff]
  %v402 = vld [vmem:[%s4 + $0x38] sm:$0xff]
  %s403 = scalar_lea.vmem %s4, 64
  %v404 = vld [vmem:[%s403] sm:$0xff]
  %v405 = vld [vmem:[%s403 + $0x8] sm:$0xff]
  %v406 = vld [vmem:[%s403 + $0x10] sm:$0xff]
  %v407 = vld [vmem:[%s403 + $0x18] sm:$0xff]
  %v408 = vld [vmem:[%s403 + $0x20] sm:$0xff]
  %v409 = vld [vmem:[%s403 + $0x28] sm:$0xff]
  %v410 = vld [vmem:[%s403 + $0x30] sm:$0xff]
  %v411 = vld [vmem:[%s403 + $0x38] sm:$0xff]
  %v413 = vsel %vm298, %v385, 0
  %415 = vmatprep.subr.mxu0 0.0
  %416 = vmatpush1.msra.mxu0 0.0
  %417 = vmatprep.subr.mxu0 0.0
  %418 = vmatpush1.msra.mxu0 0.0
  %419 = vmatprep.subr.mxu0 0.0
  %420 = vmatpush1.msra.mxu0 0.0
  %421 = vmatprep.subr.mxu0 0.0
  %422 = vmatpush1.msra.mxu0 0.0
  %423 = vmatprep.subr.mxu0 0.0
  %424 = vmatpush1.msra.mxu0 0.0
  %425 = vmatprep.subr.mxu0 0.0
  %426 = vmatpush1.msra.mxu0 0.0
  %427 = vmatprep.subr.mxu0 0.0
  %428 = vmatpush1.msra.mxu0 0.0
  %429 = vmatprep.subr.mxu0 0.0
  %430 = vmatpush1.msra.mxu0 0.0
  %431 = vmatprep.subr.mxu0 0.0
  %432 = vmatpush1.msra.mxu0 %v411
  %433 = vmatprep.subr.mxu0 0.0
  %434 = vmatpush1.msra.mxu0 %v410
  %435 = vmatprep.subr.mxu0 0.0
  %436 = vmatpush1.msra.mxu0 %v409
  %437 = vmatprep.subr.mxu0 0.0
  %438 = vmatpush1.msra.mxu0 %v408
  %439 = vmatprep.subr.mxu0 0.0
  %440 = vmatpush1.msra.mxu0 %v407
  %441 = vmatprep.subr.mxu0 0.0
  %442 = vmatpush1.msra.mxu0 %v406
  %443 = vmatprep.subr.mxu0 0.0
  %444 = vmatpush1.msra.mxu0 %v405
  %445 = vmatprep.subr.mxu0 0.0
  %446 = vmatpush1.msra.mxu0 %v404
  %447 = vmatprep.subr.mxu0 0.0
  %448 = vmatpush2.msra.mxu0 0.0
  %449 = vmatprep.subr.mxu0 0.0
  %450 = vmatpush2.msra.mxu0 0.0
  %451 = vmatprep.subr.mxu0 0.0
  %452 = vmatpush2.msra.mxu0 0.0
  %453 = vmatprep.subr.mxu0 0.0
  %454 = vmatpush2.msra.mxu0 0.0
  %455 = vmatprep.subr.mxu0 0.0
  %456 = vmatpush2.msra.mxu0 0.0
  %457 = vmatprep.subr.mxu0 0.0
  %458 = vmatpush2.msra.mxu0 0.0
  %459 = vmatprep.subr.mxu0 0.0
  %460 = vmatpush2.msra.mxu0 0.0
  %461 = vmatprep.subr.mxu0 0.0
  %462 = vmatpush2.msra.mxu0 0.0
  %463 = vmatprep.subr.mxu0 0.0
  %464 = vmatpush2.msra.mxu0 0.0
  %465 = vmatprep.subr.mxu0 0.0
  %466 = vmatpush2.msra.mxu0 0.0
  %467 = vmatprep.subr.mxu0 0.0
  %468 = vmatpush2.msra.mxu0 0.0
  %469 = vmatprep.subr.mxu0 0.0
  %470 = vmatpush2.msra.mxu0 0.0
  %471 = vmatprep.subr.mxu0 0.0
  %472 = vmatpush2.msra.mxu0 0.0
  %473 = vmatprep.subr.mxu0 0.0
  %474 = vmatpush2.msra.mxu0 0.0
  %475 = vmatprep.subr.mxu0 0.0
  %476 = vmatpush2.msra.mxu0 0.0
  %477 = vmatprep.subr.mxu0 0.0
  %478 = vmatpush2.msra.mxu0 0.0
  %479 = vmatprep.mubr.f32.mxu0 0.0
  %480 = vmatmul.mubr.f32.gmra.mxu0 %v413
  %v481 = vpop.f32.mrf.mxu0
  %v482 = vadd.f32 0.0, %v481
  %v483 = vpop.f32.mrf.mxu0
  %484 = vdwg.mxu0
  %v486 = vsel %vm298, %v382, 0
  %488 = vmatprep.subr.mxu0 0.0
  %489 = vmatpush1.msra.mxu0 0.0
  %490 = vmatprep.subr.mxu0 0.0
  %491 = vmatpush1.msra.mxu0 0.0
  %492 = vmatprep.subr.mxu0 0.0
  %493 = vmatpush1.msra.mxu0 0.0
  %494 = vmatprep.subr.mxu0 0.0
  %495 = vmatpush1.msra.mxu0 0.0
  %496 = vmatprep.subr.mxu0 0.0
  %497 = vmatpush1.msra.mxu0 0.0
  %498 = vmatprep.subr.mxu0 0.0
  %499 = vmatpush1.msra.mxu0 0.0
  %500 = vmatprep.subr.mxu0 0.0
  %501 = vmatpush1.msra.mxu0 0.0
  %502 = vmatprep.subr.mxu0 0.0
  %503 = vmatpush1.msra.mxu0 0.0
  %504 = vmatprep.subr.mxu0 0.0
  %505 = vmatpush1.msra.mxu0 %v402
  %506 = vmatprep.subr.mxu0 0.0
  %507 = vmatpush1.msra.mxu0 %v401
  %508 = vmatprep.subr.mxu0 0.0
  %509 = vmatpush1.msra.mxu0 %v400
  %510 = vmatprep.subr.mxu0 0.0
  %511 = vmatpush1.msra.mxu0 %v399
  %512 = vmatprep.subr.mxu0 0.0
  %513 = vmatpush1.msra.mxu0 %v398
  %514 = vmatprep.subr.mxu0 0.0
  %515 = vmatpush1.msra.mxu0 %v397
  %516 = vmatprep.subr.mxu0 0.0
  %517 = vmatpush1.msra.mxu0 %v396
  %518 = vmatprep.subr.mxu0 0.0
  %519 = vmatpush1.msra.mxu0 %v395
  %520 = vmatprep.subr.mxu0 0.0
  %521 = vmatpush2.msra.mxu0 0.0
  %522 = vmatprep.subr.mxu0 0.0
  %523 = vmatpush2.msra.mxu0 0.0
  %524 = vmatprep.subr.mxu0 0.0
  %525 = vmatpush2.msra.mxu0 0.0
  %526 = vmatprep.subr.mxu0 0.0
  %527 = vmatpush2.msra.mxu0 0.0
  %528 = vmatprep.subr.mxu0 0.0
  %529 = vmatpush2.msra.mxu0 0.0
  %530 = vmatprep.subr.mxu0 0.0
  %531 = vmatpush2.msra.mxu0 0.0
  %532 = vmatprep.subr.mxu0 0.0
  %533 = vmatpush2.msra.mxu0 0.0
  %534 = vmatprep.subr.mxu0 0.0
  %535 = vmatpush2.msra.mxu0 0.0
  %536 = vmatprep.subr.mxu0 0.0
  %537 = vmatpush2.msra.mxu0 0.0
  %538 = vmatprep.subr.mxu0 0.0
  %539 = vmatpush2.msra.mxu0 0.0
  %540 = vmatprep.subr.mxu0 0.0
  %541 = vmatpush2.msra.mxu0 0.0
  %542 = vmatprep.subr.mxu0 0.0
  %543 = vmatpush2.msra.mxu0 0.0
  %544 = vmatprep.subr.mxu0 0.0
  %545 = vmatpush2.msra.mxu0 0.0
  %546 = vmatprep.subr.mxu0 0.0
  %547 = vmatpush2.msra.mxu0 0.0
  %548 = vmatprep.subr.mxu0 0.0
  %549 = vmatpush2.msra.mxu0 0.0
  %550 = vmatprep.subr.mxu0 0.0
  %551 = vmatpush2.msra.mxu0 0.0
  %552 = vmatprep.mubr.f32.mxu0 0.0
  %553 = vmatmul.mubr.f32.gmra.mxu0 %v486
  %v554 = vpop.f32.mrf.mxu0
  %v555 = vadd.f32 %v482, %v554
  %v556 = vpop.f32.mrf.mxu0
  %557 = vdwg.mxu0
  %s558 = scalar_lea.vmem %s4, 128
  %v559 = vld [vmem:[%s558] sm:$0xff]
  %v560 = vld [vmem:[%s558 + $0x8] sm:$0xff]
  %v561 = vld [vmem:[%s558 + $0x10] sm:$0xff]
  %v562 = vld [vmem:[%s558 + $0x18] sm:$0xff]
  %v563 = vld [vmem:[%s558 + $0x20] sm:$0xff]
  %v564 = vld [vmem:[%s558 + $0x28] sm:$0xff]
  %v565 = vld [vmem:[%s558 + $0x30] sm:$0xff]
  %v566 = vld [vmem:[%s558 + $0x38] sm:$0xff]
  %v568 = vsel %vm298, %v390, 0
  %570 = vmatprep.subr.mxu0 0.0
  %571 = vmatpush1.msra.mxu0 0.0
  %572 = vmatprep.subr.mxu0 0.0
  %573 = vmatpush1.msra.mxu0 0.0
  %574 = vmatprep.subr.mxu0 0.0
  %575 = vmatpush1.msra.mxu0 0.0
  %576 = vmatprep.subr.mxu0 0.0
  %577 = vmatpush1.msra.mxu0 0.0
  %578 = vmatprep.subr.mxu0 0.0
  %579 = vmatpush1.msra.mxu0 0.0
  %580 = vmatprep.subr.mxu0 0.0
  %581 = vmatpush1.msra.mxu0 0.0
  %582 = vmatprep.subr.mxu0 0.0
  %583 = vmatpush1.msra.mxu0 0.0
  %584 = vmatprep.subr.mxu0 0.0
  %585 = vmatpush1.msra.mxu0 0.0
  %586 = vmatprep.subr.mxu0 0.0
  %587 = vmatpush1.msra.mxu0 %v566
  %588 = vmatprep.subr.mxu0 0.0
  %589 = vmatpush1.msra.mxu0 %v565
  %590 = vmatprep.subr.mxu0 0.0
  %591 = vmatpush1.msra.mxu0 %v564
  %592 = vmatprep.subr.mxu0 0.0
  %593 = vmatpush1.msra.mxu0 %v563
  %594 = vmatprep.subr.mxu0 0.0
  %595 = vmatpush1.msra.mxu0 %v562
  %596 = vmatprep.subr.mxu0 0.0
  %597 = vmatpush1.msra.mxu0 %v561
  %598 = vmatprep.subr.mxu0 0.0
  %599 = vmatpush1.msra.mxu0 %v560
  %600 = vmatprep.subr.mxu0 0.0
  %601 = vmatpush1.msra.mxu0 %v559
  %602 = vmatprep.subr.mxu0 0.0
  %603 = vmatpush2.msra.mxu0 0.0
  %604 = vmatprep.subr.mxu0 0.0
  %605 = vmatpush2.msra.mxu0 0.0
  %606 = vmatprep.subr.mxu0 0.0
  %607 = vmatpush2.msra.mxu0 0.0
  %608 = vmatprep.subr.mxu0 0.0
  %609 = vmatpush2.msra.mxu0 0.0
  %610 = vmatprep.subr.mxu0 0.0
  %611 = vmatpush2.msra.mxu0 0.0
  %612 = vmatprep.subr.mxu0 0.0
  %613 = vmatpush2.msra.mxu0 0.0
  %614 = vmatprep.subr.mxu0 0.0
  %615 = vmatpush2.msra.mxu0 0.0
  %616 = vmatprep.subr.mxu0 0.0
  %617 = vmatpush2.msra.mxu0 0.0
  %618 = vmatprep.subr.mxu0 0.0
  %619 = vmatpush2.msra.mxu0 0.0
  %620 = vmatprep.subr.mxu0 0.0
  %621 = vmatpush2.msra.mxu0 0.0
  %622 = vmatprep.subr.mxu0 0.0
  %623 = vmatpush2.msra.mxu0 0.0
  %624 = vmatprep.subr.mxu0 0.0
  %625 = vmatpush2.msra.mxu0 0.0
  %626 = vmatprep.subr.mxu0 0.0
  %627 = vmatpush2.msra.mxu0 0.0
  %628 = vmatprep.subr.mxu0 0.0
  %629 = vmatpush2.msra.mxu0 0.0
  %630 = vmatprep.subr.mxu0 0.0
  %631 = vmatpush2.msra.mxu0 0.0
  %632 = vmatprep.subr.mxu0 0.0
  %633 = vmatpush2.msra.mxu0 0.0
  %634 = vmatprep.mubr.f32.mxu0 0.0
  %635 = vmatmul.mubr.f32.gmra.mxu0 %v568
  %v636 = vpop.f32.mrf.mxu0
  %v637 = vadd.f32 0.0, %v636
  %v638 = vpop.f32.mrf.mxu0
  %639 = vdwg.mxu0
  %v640 = vadd.f32 %v555, %v637
  %v641 = vand.u32 2147483647, %v640
  %643 = vrot.lane.b32.xlu0 %v641, 120
  %v644 = vpop.permute.xlu0 %643
  %v646 = vadd.f32 %v641, %v644
  %v647 = vmul.f32 %v646, 0.5
  %vm648 = vcmask 64512
  %v649 = vsel %vm648, %v647, -inf
  %650 = vmax.xlane.f32.xlu0 %v649
  %v651 = vpop.xlane.xlu0 %650
  %v652 = vrot.slane %v651, 4
  %v653 = vmax.f32 %v651, %v652
  %v654 = vrot.slane %v653, 2
  %v655 = vmax.f32 %v653, %v654
  %v656 = vrot.slane %v655, 1
  %v657 = vmax.f32 %v655, %v656
  %v658 = vsel %vm648, %v647, inf
  %659 = vmin.xlane.f32.xlu0 %v658
  %v660 = vpop.xlane.xlu0 %659
  %v661 = vrot.slane %v660, 4
  %v662 = vmin.f32 %v660, %v661
  %v663 = vrot.slane %v662, 2
  %v664 = vmin.f32 %v662, %v663
  %v665 = vrot.slane %v664, 1
  %v666 = vmin.f32 %v664, %v665
  %v667 = vsub.f32 %v657, %v666
  %v668 = vadd.f32 %v667, 1e-06
  %v669 = vrcp.pop %v668
  %v670 = vsub.f32 %v647, %v666
  %v671 = vmul.f32 %v670, %v669
  %v673 = vrot.slane %v671, 1
  %674 = vrot.lane.b32.xlu0 %v673, 8
  %v675 = vpop.permute.xlu0 %674
  %v677 = vrot.slane %v671, 2
  %678 = vrot.lane.b32.xlu0 %v677, 16
  %v679 = vpop.permute.xlu0 %678
  %v681 = vrot.slane %v671, 3
  %682 = vrot.lane.b32.xlu0 %v681, 24
  %v683 = vpop.permute.xlu0 %682
  %v685 = vrot.slane %v671, 4
  %686 = vrot.lane.b32.xlu0 %v685, 32
  %v687 = vpop.permute.xlu0 %686
  %v689 = vrot.slane %v671, 5
  %690 = vrot.lane.b32.xlu0 %v689, 40
  %v691 = vpop.permute.xlu0 %690
  %v693 = vrot.slane %v671, 6
  %694 = vrot.lane.b32.xlu0 %v693, 48
  %v695 = vpop.permute.xlu0 %694
  %v697 = vrot.slane %v671, 7
  %698 = vrot.lane.b32.xlu0 %v697, 56
  %v699 = vpop.permute.xlu0 %698
  %v701 = vsel %vm648, %v671, %v675
  %vm702 = vcmask 130048
  %v703 = vsel %vm702, %v701, %v679
  %vm704 = vcmask 195584
  %v705 = vsel %vm704, %v703, %v683
  %v706 = vsel %vm285, %v705, %v687
  %vm707 = vcmask 326656
  %v708 = vsel %vm707, %v706, %v691
  %vm709 = vcmask 392192
  %v710 = vsel %vm709, %v708, %v695
  %vm711 = vcmask 457728
  %v712 = vsel %vm711, %v710, %v699
  %713 = vrot.lane.b32.xlu0 %v385, 64
  %v714 = vpop.permute.xlu0 %713
  %v715 = vsel %vm298, %v714, 0
  %717 = vmatprep.subr.mxu0 0.0
  %718 = vmatpush1.msra.mxu0 0.0
  %719 = vmatprep.subr.mxu0 0.0
  %720 = vmatpush1.msra.mxu0 0.0
  %721 = vmatprep.subr.mxu0 0.0
  %722 = vmatpush1.msra.mxu0 0.0
  %723 = vmatprep.subr.mxu0 0.0
  %724 = vmatpush1.msra.mxu0 0.0
  %725 = vmatprep.subr.mxu0 0.0
  %726 = vmatpush1.msra.mxu0 0.0
  %727 = vmatprep.subr.mxu0 0.0
  %728 = vmatpush1.msra.mxu0 0.0
  %729 = vmatprep.subr.mxu0 0.0
  %730 = vmatpush1.msra.mxu0 0.0
  %731 = vmatprep.subr.mxu0 0.0
  %732 = vmatpush1.msra.mxu0 0.0
  %733 = vmatprep.subr.mxu0 0.0
  %734 = vmatpush1.msra.mxu0 %v411
  %735 = vmatprep.subr.mxu0 0.0
  %736 = vmatpush1.msra.mxu0 %v410
  %737 = vmatprep.subr.mxu0 0.0
  %738 = vmatpush1.msra.mxu0 %v409
  %739 = vmatprep.subr.mxu0 0.0
  %740 = vmatpush1.msra.mxu0 %v408
  %741 = vmatprep.subr.mxu0 0.0
  %742 = vmatpush1.msra.mxu0 %v407
  %743 = vmatprep.subr.mxu0 0.0
  %744 = vmatpush1.msra.mxu0 %v406
  %745 = vmatprep.subr.mxu0 0.0
  %746 = vmatpush1.msra.mxu0 %v405
  %747 = vmatprep.subr.mxu0 0.0
  %748 = vmatpush1.msra.mxu0 %v404
  %749 = vmatprep.subr.mxu0 0.0
  %750 = vmatpush2.msra.mxu0 0.0
  %751 = vmatprep.subr.mxu0 0.0
  %752 = vmatpush2.msra.mxu0 0.0
  %753 = vmatprep.subr.mxu0 0.0
  %754 = vmatpush2.msra.mxu0 0.0
  %755 = vmatprep.subr.mxu0 0.0
  %756 = vmatpush2.msra.mxu0 0.0
  %757 = vmatprep.subr.mxu0 0.0
  %758 = vmatpush2.msra.mxu0 0.0
  %759 = vmatprep.subr.mxu0 0.0
  %760 = vmatpush2.msra.mxu0 0.0
  %761 = vmatprep.subr.mxu0 0.0
  %762 = vmatpush2.msra.mxu0 0.0
  %763 = vmatprep.subr.mxu0 0.0
  %764 = vmatpush2.msra.mxu0 0.0
  %765 = vmatprep.subr.mxu0 0.0
  %766 = vmatpush2.msra.mxu0 0.0
  %767 = vmatprep.subr.mxu0 0.0
  %768 = vmatpush2.msra.mxu0 0.0
  %769 = vmatprep.subr.mxu0 0.0
  %770 = vmatpush2.msra.mxu0 0.0
  %771 = vmatprep.subr.mxu0 0.0
  %772 = vmatpush2.msra.mxu0 0.0
  %773 = vmatprep.subr.mxu0 0.0
  %774 = vmatpush2.msra.mxu0 0.0
  %775 = vmatprep.subr.mxu0 0.0
  %776 = vmatpush2.msra.mxu0 0.0
  %777 = vmatprep.subr.mxu0 0.0
  %778 = vmatpush2.msra.mxu0 0.0
  %779 = vmatprep.subr.mxu0 0.0
  %780 = vmatpush2.msra.mxu0 0.0
  %781 = vmatprep.mubr.f32.mxu0 0.0
  %782 = vmatmul.mubr.f32.gmra.mxu0 %v715
  %v783 = vpop.f32.mrf.mxu0
  %v784 = vadd.f32 0.0, %v783
  %v785 = vpop.f32.mrf.mxu0
  %786 = vdwg.mxu0
  %787 = vrot.lane.b32.xlu0 %v382, 64
  %v788 = vpop.permute.xlu0 %787
  %v789 = vsel %vm298, %v788, 0
  %791 = vmatprep.subr.mxu0 0.0
  %792 = vmatpush1.msra.mxu0 0.0
  %793 = vmatprep.subr.mxu0 0.0
  %794 = vmatpush1.msra.mxu0 0.0
  %795 = vmatprep.subr.mxu0 0.0
  %796 = vmatpush1.msra.mxu0 0.0
  %797 = vmatprep.subr.mxu0 0.0
  %798 = vmatpush1.msra.mxu0 0.0
  %799 = vmatprep.subr.mxu0 0.0
  %800 = vmatpush1.msra.mxu0 0.0
  %801 = vmatprep.subr.mxu0 0.0
  %802 = vmatpush1.msra.mxu0 0.0
  %803 = vmatprep.subr.mxu0 0.0
  %804 = vmatpush1.msra.mxu0 0.0
  %805 = vmatprep.subr.mxu0 0.0
  %806 = vmatpush1.msra.mxu0 0.0
  %807 = vmatprep.subr.mxu0 0.0
  %808 = vmatpush1.msra.mxu0 %v402
  %809 = vmatprep.subr.mxu0 0.0
  %810 = vmatpush1.msra.mxu0 %v401
  %811 = vmatprep.subr.mxu0 0.0
  %812 = vmatpush1.msra.mxu0 %v400
  %813 = vmatprep.subr.mxu0 0.0
  %814 = vmatpush1.msra.mxu0 %v399
  %815 = vmatprep.subr.mxu0 0.0
  %816 = vmatpush1.msra.mxu0 %v398
  %817 = vmatprep.subr.mxu0 0.0
  %818 = vmatpush1.msra.mxu0 %v397
  %819 = vmatprep.subr.mxu0 0.0
  %820 = vmatpush1.msra.mxu0 %v396
  %821 = vmatprep.subr.mxu0 0.0
  %822 = vmatpush1.msra.mxu0 %v395
  %823 = vmatprep.subr.mxu0 0.0
  %824 = vmatpush2.msra.mxu0 0.0
  %825 = vmatprep.subr.mxu0 0.0
  %826 = vmatpush2.msra.mxu0 0.0
  %827 = vmatprep.subr.mxu0 0.0
  %828 = vmatpush2.msra.mxu0 0.0
  %829 = vmatprep.subr.mxu0 0.0
  %830 = vmatpush2.msra.mxu0 0.0
  %831 = vmatprep.subr.mxu0 0.0
  %832 = vmatpush2.msra.mxu0 0.0
  %833 = vmatprep.subr.mxu0 0.0
  %834 = vmatpush2.msra.mxu0 0.0
  %835 = vmatprep.subr.mxu0 0.0
  %836 = vmatpush2.msra.mxu0 0.0
  %837 = vmatprep.subr.mxu0 0.0
  %838 = vmatpush2.msra.mxu0 0.0
  %839 = vmatprep.subr.mxu0 0.0
  %840 = vmatpush2.msra.mxu0 0.0
  %841 = vmatprep.subr.mxu0 0.0
  %842 = vmatpush2.msra.mxu0 0.0
  %843 = vmatprep.subr.mxu0 0.0
  %844 = vmatpush2.msra.mxu0 0.0
  %845 = vmatprep.subr.mxu0 0.0
  %846 = vmatpush2.msra.mxu0 0.0
  %847 = vmatprep.subr.mxu0 0.0
  %848 = vmatpush2.msra.mxu0 0.0
  %849 = vmatprep.subr.mxu0 0.0
  %850 = vmatpush2.msra.mxu0 0.0
  %851 = vmatprep.subr.mxu0 0.0
  %852 = vmatpush2.msra.mxu0 0.0
  %853 = vmatprep.subr.mxu0 0.0
  %854 = vmatpush2.msra.mxu0 0.0
  %855 = vmatprep.mubr.f32.mxu0 0.0
  %856 = vmatmul.mubr.f32.gmra.mxu0 %v789
  %v857 = vpop.f32.mrf.mxu0
  %v858 = vadd.f32 %v784, %v857
  %v859 = vpop.f32.mrf.mxu0
  %860 = vdwg.mxu0
  %861 = vrot.lane.b32.xlu0 %v390, 64
  %v862 = vpop.permute.xlu0 %861
  %v863 = vsel %vm298, %v862, 0
  %865 = vmatprep.subr.mxu0 0.0
  %866 = vmatpush1.msra.mxu0 0.0
  %867 = vmatprep.subr.mxu0 0.0
  %868 = vmatpush1.msra.mxu0 0.0
  %869 = vmatprep.subr.mxu0 0.0
  %870 = vmatpush1.msra.mxu0 0.0
  %871 = vmatprep.subr.mxu0 0.0
  %872 = vmatpush1.msra.mxu0 0.0
  %873 = vmatprep.subr.mxu0 0.0
  %874 = vmatpush1.msra.mxu0 0.0
  %875 = vmatprep.subr.mxu0 0.0
  %876 = vmatpush1.msra.mxu0 0.0
  %877 = vmatprep.subr.mxu0 0.0
  %878 = vmatpush1.msra.mxu0 0.0
  %879 = vmatprep.subr.mxu0 0.0
  %880 = vmatpush1.msra.mxu0 0.0
  %881 = vmatprep.subr.mxu0 0.0
  %882 = vmatpush1.msra.mxu0 %v566
  %883 = vmatprep.subr.mxu0 0.0
  %884 = vmatpush1.msra.mxu0 %v565
  %885 = vmatprep.subr.mxu0 0.0
  %886 = vmatpush1.msra.mxu0 %v564
  %887 = vmatprep.subr.mxu0 0.0
  %888 = vmatpush1.msra.mxu0 %v563
  %889 = vmatprep.subr.mxu0 0.0
  %890 = vmatpush1.msra.mxu0 %v562
  %891 = vmatprep.subr.mxu0 0.0
  %892 = vmatpush1.msra.mxu0 %v561
  %893 = vmatprep.subr.mxu0 0.0
  %894 = vmatpush1.msra.mxu0 %v560
  %895 = vmatprep.subr.mxu0 0.0
  %896 = vmatpush1.msra.mxu0 %v559
  %897 = vmatprep.subr.mxu0 0.0
  %898 = vmatpush2.msra.mxu0 0.0
  %899 = vmatprep.subr.mxu0 0.0
  %900 = vmatpush2.msra.mxu0 0.0
  %901 = vmatprep.subr.mxu0 0.0
  %902 = vmatpush2.msra.mxu0 0.0
  %903 = vmatprep.subr.mxu0 0.0
  %904 = vmatpush2.msra.mxu0 0.0
  %905 = vmatprep.subr.mxu0 0.0
  %906 = vmatpush2.msra.mxu0 0.0
  %907 = vmatprep.subr.mxu0 0.0
  %908 = vmatpush2.msra.mxu0 0.0
  %909 = vmatprep.subr.mxu0 0.0
  %910 = vmatpush2.msra.mxu0 0.0
  %911 = vmatprep.subr.mxu0 0.0
  %912 = vmatpush2.msra.mxu0 0.0
  %913 = vmatprep.subr.mxu0 0.0
  %914 = vmatpush2.msra.mxu0 0.0
  %915 = vmatprep.subr.mxu0 0.0
  %916 = vmatpush2.msra.mxu0 0.0
  %917 = vmatprep.subr.mxu0 0.0
  %918 = vmatpush2.msra.mxu0 0.0
  %919 = vmatprep.subr.mxu0 0.0
  %920 = vmatpush2.msra.mxu0 0.0
  %921 = vmatprep.subr.mxu0 0.0
  %922 = vmatpush2.msra.mxu0 0.0
  %923 = vmatprep.subr.mxu0 0.0
  %924 = vmatpush2.msra.mxu0 0.0
  %925 = vmatprep.subr.mxu0 0.0
  %926 = vmatpush2.msra.mxu0 0.0
  %927 = vmatprep.subr.mxu0 0.0
  %928 = vmatpush2.msra.mxu0 0.0
  %929 = vmatprep.mubr.f32.mxu0 0.0
  %930 = vmatmul.mubr.f32.gmra.mxu0 %v863
  %v931 = vpop.f32.mrf.mxu0
  %v932 = vadd.f32 0.0, %v931
  %v933 = vpop.f32.mrf.mxu0
  %934 = vdwg.mxu0
  %v935 = vadd.f32 %v858, %v932
  %v936 = vand.u32 2147483647, %v935
  %938 = vrot.lane.b32.xlu0 %v936, 120
  %v939 = vpop.permute.xlu0 %938
  %v941 = vadd.f32 %v936, %v939
  %v942 = vmul.f32 %v941, 0.5
  %v943 = vsel %vm648, %v942, -inf
  %944 = vmax.xlane.f32.xlu0 %v943
  %v945 = vpop.xlane.xlu0 %944
  %v946 = vrot.slane %v945, 4
  %v947 = vmax.f32 %v945, %v946
  %v948 = vrot.slane %v947, 2
  %v949 = vmax.f32 %v947, %v948
  %v950 = vrot.slane %v949, 1
  %v951 = vmax.f32 %v949, %v950
  %v952 = vsel %vm648, %v942, inf
  %953 = vmin.xlane.f32.xlu0 %v952
  %v954 = vpop.xlane.xlu0 %953
  %v955 = vrot.slane %v954, 4
  %v956 = vmin.f32 %v954, %v955
  %v957 = vrot.slane %v956, 2
  %v958 = vmin.f32 %v956, %v957
  %v959 = vrot.slane %v958, 1
  %v960 = vmin.f32 %v958, %v959
  %v961 = vsub.f32 %v951, %v960
  %v962 = vadd.f32 %v961, 1e-06
  %v963 = vrcp.pop %v962
  %v964 = vsub.f32 %v942, %v960
  %v965 = vmul.f32 %v964, %v963
  %v967 = vrot.slane %v965, 1
  %968 = vrot.lane.b32.xlu0 %v967, 8
  %v969 = vpop.permute.xlu0 %968
  %v971 = vrot.slane %v965, 2
  %972 = vrot.lane.b32.xlu0 %v971, 16
  %v973 = vpop.permute.xlu0 %972
  %v975 = vrot.slane %v965, 3
  %976 = vrot.lane.b32.xlu0 %v975, 24
  %v977 = vpop.permute.xlu0 %976
  %v979 = vrot.slane %v965, 4
  %980 = vrot.lane.b32.xlu0 %v979, 32
  %v981 = vpop.permute.xlu0 %980
  %v983 = vrot.slane %v965, 5
  %984 = vrot.lane.b32.xlu0 %v983, 40
  %v985 = vpop.permute.xlu0 %984
  %v987 = vrot.slane %v965, 6
  %988 = vrot.lane.b32.xlu0 %v987, 48
  %v989 = vpop.permute.xlu0 %988
  %v991 = vrot.slane %v965, 7
  %992 = vrot.lane.b32.xlu0 %v991, 56
  %v993 = vpop.permute.xlu0 %992
  %v995 = vsel %vm648, %v965, %v969
  %v996 = vsel %vm702, %v995, %v973
  %v997 = vsel %vm704, %v996, %v977
  %v998 = vsel %vm285, %v997, %v981
  %v999 = vsel %vm707, %v998, %v985
  %v1000 = vsel %vm709, %v999, %v989
  %v1001 = vsel %vm711, %v1000, %v993
  %v1003 = vrot.slane %v1001, 7
  %vm1005 = vcmask 1040384
  %v1006 = vsel %vm1005, %v712, %v1003
  %vm1007 = vcmask 517120
  %1008 = vst.msk [vmem:[%s5] sm:$0x3] %vm1007, %v1006
  // Predicated region
  $region22: #{forward.1} parent=0 // pred_check
    _
  $region23: #{forward.1} parent=0 // pred_check_branch
    %1010 = sbr.rel (0) target = $region25
  $region24: #{forward.1} parent=0 // pred_region
    _
  $region25: #{forward.1} parent=0 // pred_fallthru
    _
  // Predicated region
  $region26: #{forward.1} parent=0 // pred_check
    _
  $region27: #{forward.1} parent=0 // pred_check_branch
    %1012 = sbr.rel (0) target = $region29
  $region28: #{forward.1} parent=0 // pred_region
    _
  $region29: #{forward.1} parent=0 // pred_fallthru
    _

</llo_original>
